<compile_context>
chip_gen: v7x
topology: tpu7x:2x2x1
jax: 0.10.0
libtpu: 0.0.40
codegen_flags: <defaults>
</compile_context>

<pallas_src>
import functools

import jax
import jax.numpy as jnp
from jax.experimental import pallas as pl
from jax.experimental.pallas import tpu as pltpu

_LANE = 128  # vreg lane width


def _cdiv(a: int, b: int) -> int:
    return -(-a // b)


def _round_up(a: int, b: int) -> int:
    return _cdiv(a, b) * b


def _mswish_kernel(x_ref, o_ref, *, alpha: float):
    xf = x_ref[...].astype(jnp.float32)
    # Numerically stable sigmoid with a single EUP push (tanh); no overflow
    # path, no approximate reciprocal.
    sig = 0.5 * (jnp.tanh(0.5 * xf) + 1.0)
    xs = xf * sig
    y = jnp.where(xf < 0.0, (alpha * alpha) * xf * xs, alpha * xs)
    o_ref[...] = y.astype(o_ref.dtype)


def _mswish_jnp(x: jax.Array, alpha: float) -> jax.Array:
    xf = x.astype(jnp.float32)
    sig = jax.nn.sigmoid(xf)
    xs = xf * sig
    y = jnp.where(xf < 0.0, (alpha * alpha) * xf * xs, alpha * xs)
    return y.astype(x.dtype)


def _num_tensorcores() -> int:
    """Best-effort count of TensorCores a 'parallel' grid axis can shard over."""
    try:
        dev = jax.devices()[0]
        if dev.platform != "tpu":
            return 1
        kind = str(getattr(dev, "device_kind", "")).lower()
        if "v7" in kind:
            return 2
        nc = getattr(dev, "num_cores", None)
        if isinstance(nc, int) and nc > 0:
            return nc
    except Exception:
        pass
    return 1


def _pick_tile_rows(rows: int, sublane: int, max_tile_rows: int, num_tc: int) -> int:
    """Largest sublane-aligned tile <= max_tile_rows; balance steps on 2-TC chips."""
    tr = max(sublane, (min(max_tile_rows, rows) // sublane) * sublane)
    if num_tc < 2:
        return tr  # single TensorCore: biggest block, fewest steps
    steps = _cdiv(rows, tr)
    if steps % 2 == 0:
        return tr
    # Odd step count (including 1) leaves one v7x TensorCore under-used; re-tile
    # to an even number of roughly equal, sublane-aligned blocks when possible.
    prefs = (4, 2) if steps == 1 else (steps + 1,)
    for want in prefs:
        cand = max(sublane, _round_up(_cdiv(rows, want), sublane))
        if _cdiv(rows, cand) % 2 == 0:
            return cand
    return tr


def mswish(
    x: jax.Array,
    alpha: float = 0.25,
    *,
    block_bytes: int = 4 * 1024 * 1024,
    min_pallas_bytes: int = 256 * 1024,
) -> jax.Array:
    """Elementwise MSwish via Pallas. Floating dtypes only."""
    if not jnp.issubdtype(x.dtype, jnp.floating):
        raise TypeError(f"mswish requires a floating dtype, got {x.dtype}")

    orig_shape = x.shape
    n = x.size
    if n == 0:
        return x
    itemsize = jnp.dtype(x.dtype).itemsize

    # Tiny activations: XLA's fused elementwise beats pallas_call launch + DMA
    # setup + per-step overhead.
    if n * itemsize < min_pallas_bytes:
        return _mswish_jnp(x, alpha)

    x_flat = jnp.ravel(x)
    n_tail = n % _LANE
    n_main = n - n_tail
    if n_main == 0:
        return _mswish_jnp(x, alpha)

    # dtype-aware minimum sublane unit: (8,128) f32, (16,128) bf16, (32,128) 1B.
    sublane = max(8, 32 // itemsize)
    rows = n_main // _LANE
    max_tile_rows = max(sublane, (block_bytes // (_LANE * itemsize)) // sublane * sublane)
    tr = _pick_tile_rows(rows, sublane, max_tile_rows, _num_tensorcores())
    grid = (_cdiv(rows, tr),)

    # Zero-copy main slab: ragged last row-block is handled by Pallas masking.
    x2d = x_flat[:n_main].reshape(rows, _LANE)

    block_bytes_actual = tr * _LANE * itemsize
    vmem_limit = min(48 * 1024 * 1024,
                     max(32 * 1024 * 1024, 4 * block_bytes_actual + 8 * 1024 * 1024))

    out2d = pl.pallas_call(
        functools.partial(_mswish_kernel, alpha=float(alpha)),
        out_shape=jax.ShapeDtypeStruct((rows, _LANE), x.dtype),
        grid_spec=pltpu.PrefetchScalarGridSpec(
            num_scalar_prefetch=0,
            grid=grid,
            in_specs=[pl.BlockSpec((tr, _LANE), lambda i: (i, 0))],
            out_specs=pl.BlockSpec((tr, _LANE), lambda i: (i, 0)),
        ),
        compiler_params=pltpu.CompilerParams(
            dimension_semantics=("parallel",),
            vmem_limit_bytes=vmem_limit,
        ),
        cost_estimate=pl.CostEstimate(
            flops=8 * n_main,
            transcendentals=n_main,
            bytes_accessed=2 * n_main * itemsize,
        ),
    )(x2d)

    out_flat = jnp.ravel(out2d)
    if n_tail:
        # Tiny (<128 element) tail: plain jnp, then append.
        out_flat = jnp.concatenate([out_flat, _mswish_jnp(x_flat[n_main:], alpha)])
    return out_flat.reshape(orig_shape)


if __name__ == "__main__":
    alpha = 0.25

    def ref(x):
        xf = x.astype(jnp.float32)
        sig = jax.nn.sigmoid(xf)
        return jnp.where(xf < 0, alpha * alpha * xf * xf * sig, alpha * xf * sig)

    # NCHW, matching the PyTorch module's typical use; min_pallas_bytes=0
    # forces the Pallas path even at this small demo size.
    x = jax.random.normal(jax.random.PRNGKey(0), (2, 4, 16, 16), dtype=jnp.float32)
    y = mswish(x, alpha, min_pallas_bytes=0)
    jax.block_until_ready(y)
    assert y.shape == x.shape and y.dtype == x.dtype
    assert jnp.allclose(y.astype(jnp.float32), ref(x), atol=2e-3, rtol=2e-3)

    # Odd flat size (1155 = 9*128 + 3): exercises the zero-copy main slab plus
    # the tiny jnp tail, with larger-magnitude values.
    x2 = jax.random.normal(jax.random.PRNGKey(1), (3, 5, 7, 11), dtype=jnp.float32) * 3.0
    y2 = mswish(x2, alpha, min_pallas_bytes=0)
    jax.block_until_ready(y2)
    assert y2.shape == x2.shape and y2.dtype == x2.dtype
    assert jnp.allclose(y2.astype(jnp.float32), ref(x2), atol=2e-3, rtol=2e-3)

    # bf16 path (16-row sublane unit).
    x3 = jax.random.normal(jax.random.PRNGKey(2), (2, 16, 128), dtype=jnp.bfloat16)
    y3 = mswish(x3, alpha, min_pallas_bytes=0)
    jax.block_until_ready(y3)
    assert y3.shape == x3.shape and y3.dtype == x3.dtype
    assert jnp.allclose(y3.astype(jnp.float32), ref(x3.astype(jnp.float32)),
                        atol=5e-2, rtol=5e-2)

    print("KERNEL_OK")
</pallas_src>

<mosaic_0001>
module attributes {stable_mosaic.version = 11 : i64} {
  func.func @_mswish_kernel(%arg0: i32, %arg1: memref<16x128xf32, #tpu.memory_space<vmem>>, %arg2: memref<16x128xf32, #tpu.memory_space<vmem>>) attributes {dimension_semantics = [#tpu.dimension_semantics<parallel>], iteration_bounds = array<i64: 1>, scalar_prefetch = 0 : i64, scratch_operands = 0 : i64, tpu.core_type = #tpu.core_type<tc>, window_params = [{transform_indices = @transform_0, window_bounds = array<i64: 16, 128>}, {transform_indices = @transform_1, window_bounds = array<i64: 16, 128>}]} {
    %c0 = arith.constant 0 : index
    %c0_0 = arith.constant 0 : index
    %0 = vector.load %arg1[%c0, %c0_0] : memref<16x128xf32, #tpu.memory_space<vmem>>, vector<16x128xf32>
    %cst = arith.constant 5.000000e-01 : f32
    %1 = vector.broadcast %cst : f32 to vector<16x128xf32>
    %2 = arith.mulf %1, %0 : vector<16x128xf32>
    %3 = math.tanh %2 : vector<16x128xf32>
    %cst_1 = arith.constant 1.000000e+00 : f32
    %4 = vector.broadcast %cst_1 : f32 to vector<16x128xf32>
    %5 = arith.addf %3, %4 : vector<16x128xf32>
    %cst_2 = arith.constant 5.000000e-01 : f32
    %6 = vector.broadcast %cst_2 : f32 to vector<16x128xf32>
    %7 = arith.mulf %6, %5 : vector<16x128xf32>
    %8 = arith.mulf %0, %7 : vector<16x128xf32>
    %cst_3 = arith.constant 0.000000e+00 : f32
    %9 = vector.broadcast %cst_3 : f32 to vector<16x128xf32>
    %10 = arith.cmpf olt, %0, %9 : vector<16x128xf32>
    %cst_4 = arith.constant 6.250000e-02 : f32
    %11 = vector.broadcast %cst_4 : f32 to vector<16x128xf32>
    %12 = arith.mulf %11, %0 : vector<16x128xf32>
    %13 = arith.mulf %12, %8 : vector<16x128xf32>
    %cst_5 = arith.constant 2.500000e-01 : f32
    %14 = vector.broadcast %cst_5 : f32 to vector<16x128xf32>
    %15 = arith.mulf %14, %8 : vector<16x128xf32>
    %16 = arith.select %10, %13, %15 : vector<16x128xi1>, vector<16x128xf32>
    %c0_6 = arith.constant 0 : index
    %c0_7 = arith.constant 0 : index
    %17 = vector.load %arg2[%c0_6, %c0_7] : memref<16x128xf32, #tpu.memory_space<vmem>>, vector<16x128xf32>
    tpu.vector_store %arg2[%c0_6, %c0_7], %16 {strides = array<i32>} : memref<16x128xf32, #tpu.memory_space<vmem>>, vector<16x128xf32>,
    return
  }
  func.func @transform_0(%arg0: i32) -> (i32, i32) {
    %c0_i32 = arith.constant 0 : i32
    %c0_i32_0 = arith.constant 0 : i32
    return %arg0, %c0_i32 : i32, i32
  }
  func.func @transform_1(%arg0: i32) -> (i32, i32) {
    %c0_i32 = arith.constant 0 : i32
    %c0_i32_0 = arith.constant 0 : i32
    return %arg0, %c0_i32 : i32, i32
  }
}

</mosaic_0001>

<llo_original>
// kernel: tpu_custom_call.1
$region0: #{tpu_custom_call.1}
  #allocation0 [shape = 'u32[]', space=smem, size = 0x4, offset = 0x4, fixed_abs, tag = 'smem constant byte address 0x4 - core index']
  #allocation1 [shape = 'u32[144,128]{1,0:T(1,128)}', space=vmem, size = 0x12000, scoped, tag = 'internal scratch']
  %s0 = inlined_call_operand.hbm [shape: f32[16,128], index: 0, kind: input, shape index: {}]
  %s1 = inlined_call_operand.hbm [shape: f32[16,128], index: 1, kind: output, shape index: {}]
  %s2 = sld [smem:[#allocation0]]
  $region18: #{tpu_custom_call.1} parent=0
    _
  %s4 = ssub.s32 1, %s2
  %s5 = scalar_select 0, %s4, %s2
  $region1: #{tpu_custom_call.1} parent=0
    #allocation2 [shape = 'u8[8192]{0}', space=vmem, size = 0x2000, scoped, tag = 'input window, operand 0, single buffered']
    #allocation3 [shape = 's32[1]{0}', space=sflag, size = 0x4, scoped, tag = 'scoped memory for tpu_custom_call.1']
    #allocation4 [shape = 's32[1]{0}', space=sflag, size = 0x4, scoped, tag = 'scoped memory for tpu_custom_call.1']
    #allocation5 [shape = 'u8[8192]{0}', space=vmem, size = 0x2000, scoped, tag = 'output window, operand 0, single buffered']
    %6 = vsyncpa [#allocation3], 0
    %7 = vsyncpa [#allocation4], 0
    // Predicated region
    $region2: #{tpu_custom_call.1} parent=1 // pred_check
      _
    $region3: #{tpu_custom_call.1} parent=1 // pred_check_branch
      %9 = sbr.rel (0) target = $region5
    $region4: #{tpu_custom_call.1} parent=1 // pred_region
      %s11 = ssub.s32 256, 256
      %12 = vsyncadd [#allocation3], %s11
      %s13 = sshll.u32 [#allocation2], 4
      %s14 = int_to_ptr.vmem [resolvable:$true] %s13
      %19 = dma.hbm_to_vmem [thread:$0]  %s0, 256, %s14, [#allocation3], 128, 128, 8
    $region5: #{tpu_custom_call.1} parent=1 // pred_fallthru
      _
    // Predicated region
    $region6: #{tpu_custom_call.1} parent=1 // pred_check
      _
    $region7: #{tpu_custom_call.1} parent=1 // pred_check_branch
      %21 = sbr.rel (0) target = $region9
    $region8: #{tpu_custom_call.1} parent=1 // pred_region
      %22 = dma.done [#allocation3], 256
    $region9: #{tpu_custom_call.1} parent=1 // pred_fallthru
      _
    %v23 = vld [vmem:[#allocation2] sm:$0xff]
    %v24 = vld [vmem:[#allocation2 + $0x8] sm:$0xff]
    %v25 = vmul.f32 %v23, 0.5
    %v26 = vmul.f32 %v24, 0.5
    %v27 = vtanh.pop %v25
    %v28 = vtanh.pop %v26
    %v29 = vadd.f32 %v27, 1.0
    %v30 = vadd.f32 %v28, 1.0
    %v31 = vmul.f32 %v29, 0.5
    %v32 = vmul.f32 %v30, 0.5
    %v33 = vmul.f32 %v23, %v31
    %v34 = vmul.f32 %v24, %v32
    %vm35 = vcmp.lt.f32.partialorder %v23, 0.0
    %vm36 = vcmp.lt.f32.partialorder %v24, 0.0
    %v37 = vmul.f32 %v23, 0.0625
    %v38 = vmul.f32 %v24, 0.0625
    %v39 = vmul.f32 %v37, %v33
    %v40 = vmul.f32 %v38, %v34
    %v41 = vmul.f32 %v33, 0.25
    %v42 = vmul.f32 %v34, 0.25
    %v43 = vsel %vm35, %v39, %v41
    %v44 = vsel %vm36, %v40, %v42
    %45 = vst [vmem:[#allocation5] sm:$0xff] %v43
    %46 = vst [vmem:[#allocation5 + $0x8] sm:$0xff] %v44
    // Predicated region
    $region10: #{tpu_custom_call.1} parent=1 // pred_check
      _
    $region11: #{tpu_custom_call.1} parent=1 // pred_check_branch
      %48 = sbr.rel (0) target = $region13
    $region12: #{tpu_custom_call.1} parent=1 // pred_region
      %s50 = ssub.s32 256, 256
      %51 = vsyncadd [#allocation4], %s50
      %s52 = sshll.u32 [#allocation5], 4
      %s53 = int_to_ptr.vmem [resolvable:$true] %s52
      %58 = dma.vmem_to_hbm [thread:$0]  %s53, 256, %s1, [#allocation4], 128, 128, 8
    $region13: #{tpu_custom_call.1} parent=1 // pred_fallthru
      _
    // Predicated region
    $region14: #{tpu_custom_call.1} parent=1 // pred_check
      _
    $region15: #{tpu_custom_call.1} parent=1 // pred_check_branch
      %60 = sbr.rel (0) target = $region17
    $region16: #{tpu_custom_call.1} parent=1 // pred_region
      %61 = dma.done [#allocation4], 256
    $region17: #{tpu_custom_call.1} parent=1 // pred_fallthru
      _
    %62 = vsyncpa [#allocation3], 1
    %63 = vsyncpa [#allocation4], 1

</llo_original>
